<compile_context>
chip_gen: v6e
topology: v6e:2x2x1
jax: 0.10.0
libtpu: 0.0.40
codegen_flags: <defaults>
</compile_context>

<pallas_src>
import jax
import jax.numpy as jnp
from jax.experimental import pallas as pl
from jax.experimental.pallas import tpu as pltpu


def _round_up(x, m):
    return (x + m - 1) // m * m


def _device_vmem_bytes():
    """Best-effort per-core VMEM capacity; conservative 64 MiB fallback."""
    try:
        info = pltpu.get_tpu_info()
        for name in ("vmem_capacity_bytes", "vmem_bytes", "vmem_size_bytes"):
            v = getattr(info, name, None)
            if v:
                return int(v)
    except Exception:
        pass
    return 64 * 1024 * 1024  # safe on every generation (v7x per-TC size)


def _device_is_v7():
    try:
        return "v7" in jax.devices()[0].device_kind.lower()
    except Exception:
        return False


# --------------------------------------------------------------------------
# Kernels
# --------------------------------------------------------------------------
def _ffn_kernel_accout(x_ref, w1_ref, b1_ref, w2_ref, b2_ref, o_ref):
    """f32 output: accumulate straight into the resident output tile."""
    # Grid: (i = token tile ["parallel"], k = d_ff tile ["arbitrary"]).
    k = pl.program_id(1)

    @pl.when(k == 0)
    def _():
        o_ref[...] = jnp.zeros_like(o_ref) + b2_ref[...]  # init with bias b2

    xv = x_ref[...].astype(w1_ref.dtype)  # bf16 MXU feed, f32 accumulation
    h = jnp.dot(xv, w1_ref[...], preferred_element_type=jnp.float32)
    h = jnp.maximum(h + b1_ref[...], 0.0)
    o_ref[...] += jnp.dot(h.astype(w2_ref.dtype), w2_ref[...],
                          preferred_element_type=jnp.float32)


def _ffn_kernel_scratch(x_ref, w1_ref, b1_ref, w2_ref, b2_ref, o_ref, acc_ref):
    """Non-f32 output: f32 VMEM accumulator + finalize cast."""
    k = pl.program_id(1)

    @pl.when(k == 0)
    def _():
        acc_ref[...] = jnp.zeros_like(acc_ref)

    xv = x_ref[...].astype(w1_ref.dtype)
    h = jnp.dot(xv, w1_ref[...], preferred_element_type=jnp.float32)
    h = jnp.maximum(h + b1_ref[...], 0.0)
    acc_ref[...] += jnp.dot(h.astype(w2_ref.dtype), w2_ref[...],
                            preferred_element_type=jnp.float32)

    @pl.when(k == pl.num_programs(1) - 1)
    def _():
        o_ref[...] = (acc_ref[...] + b2_ref[...]).astype(o_ref.dtype)


# --------------------------------------------------------------------------
# Params (init once, pad/cast once)
# --------------------------------------------------------------------------
def init_ffn_params(key, d, d_ff, dtype=jnp.float32):
    # Mirror nn.Linear default init: U(-1/sqrt(fan_in), 1/sqrt(fan_in)).
    k1, k2, k3, k4 = jax.random.split(key, 4)
    bound1 = 1.0 / (d ** 0.5)
    bound2 = 1.0 / (d_ff ** 0.5)
    # PyTorch stores W as [out, in]; we keep the transposed [in, out] layout.
    w1_t = jax.random.uniform(k1, (d, d_ff), dtype, -bound1, bound1)
    b1 = jax.random.uniform(k2, (d_ff,), dtype, -bound1, bound1)
    w2_t = jax.random.uniform(k3, (d_ff, d), dtype, -bound2, bound2)
    b2 = jax.random.uniform(k4, (d,), dtype, -bound2, bound2)
    return {"w1_t": w1_t, "b1": b1, "w2_t": w2_t, "b2": b2}


def prepare_ffn_params(params, compute_dtype=jnp.bfloat16):
    """One-time padding to 128-aligned feature dims + cast of the weights to
    the MXU compute dtype (bf16 by default).  Biases stay f32 (added on the
    f32 accumulator inside the kernel)."""
    d, d_ff = params["w1_t"].shape
    d_pad = _round_up(d, 128)
    dff_pad = _round_up(d_ff, 128)
    w1p = jnp.pad(params["w1_t"],
                  ((0, d_pad - d), (0, dff_pad - d_ff))).astype(compute_dtype)
    w2p = jnp.pad(params["w2_t"],
                  ((0, dff_pad - d_ff), (0, d_pad - d))).astype(compute_dtype)
    b1p = jnp.pad(params["b1"].astype(jnp.float32),
                  (0, dff_pad - d_ff)).reshape(1, dff_pad)
    b2p = jnp.pad(params["b2"].astype(jnp.float32),
                  (0, d_pad - d)).reshape(1, d_pad)
    return {"w1": w1p, "b1": b1p, "w2": w2p, "b2": b2p,
            "d": d, "d_ff": d_ff, "d_pad": d_pad, "dff_pad": dff_pad}


# --------------------------------------------------------------------------
# Tile selection (generation aware)
# --------------------------------------------------------------------------
def _pick_tk(dff_pad, desired):
    """Largest multiple of 128 that divides dff_pad and is <= desired."""
    if dff_pad <= desired:
        return dff_pad
    best, t = 128, 128
    while t <= desired:
        if dff_pad % t == 0:
            best = t
        t += 128
    return best


def _select_tiles(M, d_pad, dff_pad, w_bytes, x_bytes, out_bytes, use_scratch):
    vmem_cap = _device_vmem_bytes()
    big_vmem = vmem_cap >= 100 * 1024 * 1024          # v5e / v6e (128 MiB)
    tm = 768 if big_vmem else 512                     # MXU-roofline row tile
    tk = _pick_tk(dff_pad, 1024 if big_vmem else 512)

    # Clamp for small problems; keep tm a multiple of 8 (sublane).
    tm = _round_up(min(tm, _round_up(M, 8)), 8)
    # v7x: 2 TensorCores share the "parallel" axis -> keep >= 2 row tiles.
    if _device_is_v7() and M >= 16 and _round_up(M, tm) // tm < 2:
        tm = _round_up(pl.cdiv(M, 2), 8)

    def vmem_needed(tm_, tk_):
        per_step = (tm_ * d_pad * x_bytes        # x tile
                    + d_pad * tk_ * w_bytes      # W1 slice
                    + tk_ * 4                    # b1 slice (f32)
                    + tk_ * d_pad * w_bytes      # W2 slice
                    + d_pad * 4                  # b2 (f32)
                    + tm_ * d_pad * out_bytes)   # out tile
        need = 2 * per_step                      # double buffering
        if use_scratch:
            need += tm_ * d_pad * 4              # resident f32 accumulator
        return need

    budget = int(vmem_cap * 0.85)
    while vmem_needed(tm, tk) > budget and (tm > 64 or tk > 128):
        if tm > 64:
            tm = max(64, _round_up(tm // 2, 8))
        elif tk > 128:
            tk = _pick_tk(dff_pad, max(128, tk // 2))

    vmem_limit = int(min(int(vmem_cap * 0.9),
                         max(int(vmem_needed(tm, tk) * 1.25),
                             32 * 1024 * 1024)))
    return tm, tk, vmem_limit


# --------------------------------------------------------------------------
# Forward
# --------------------------------------------------------------------------
def ffn_pallas(x, prep):
    """x: [M, d] -> [M, d] using padded / pre-cast params from prepare_ffn_params."""
    M, d = x.shape
    assert d == prep["d"], "feature dim mismatch"
    d_pad, dff_pad = prep["d_pad"], prep["dff_pad"]
    out_dtype = x.dtype
    use_scratch = out_dtype != jnp.float32

    w_bytes = jnp.dtype(prep["w1"].dtype).itemsize
    x_bytes = jnp.dtype(x.dtype).itemsize
    out_bytes = jnp.dtype(out_dtype).itemsize
    tm, tk, vmem_limit = _select_tiles(M, d_pad, dff_pad, w_bytes, x_bytes,
                                       out_bytes, use_scratch)

    M_pad = _round_up(M, tm)
    needs_pad = (M_pad != M) or (d_pad != d)
    xp = jnp.pad(x, ((0, M_pad - M), (0, d_pad - d))) if needs_pad else x

    grid = (M_pad // tm, dff_pad // tk)

    in_specs = [
        pl.BlockSpec((tm, d_pad), lambda i, k: (i, 0)),      # x row tile
        pl.BlockSpec((d_pad, tk), lambda i, k: (0, k)),      # W1 slice
        pl.BlockSpec((1, tk), lambda i, k: (0, k)),          # b1 slice
        pl.BlockSpec((tk, d_pad), lambda i, k: (k, 0)),      # W2 slice
        pl.BlockSpec((1, d_pad), lambda i, k: (0, 0)),       # b2
    ]
    out_spec = pl.BlockSpec((tm, d_pad), lambda i, k: (i, 0))

    flops = 4 * M_pad * d_pad * dff_pad                      # 2 matmuls
    bytes_accessed = (M_pad * d_pad * x_bytes
                      + (M_pad // tm) * (2 * d_pad * dff_pad * w_bytes)
                      + (dff_pad + d_pad) * 4
                      + M_pad * d_pad * out_bytes)
    cost = pl.CostEstimate(flops=flops, transcendentals=0,
                           bytes_accessed=bytes_accessed)

    kernel = _ffn_kernel_scratch if use_scratch else _ffn_kernel_accout
    scratch = [pltpu.VMEM((tm, d_pad), jnp.float32)] if use_scratch else []

    out = pl.pallas_call(
        kernel,
        out_shape=jax.ShapeDtypeStruct((M_pad, d_pad), out_dtype),
        grid_spec=pltpu.PrefetchScalarGridSpec(
            num_scalar_prefetch=0,
            grid=grid,
            in_specs=in_specs,
            out_specs=out_spec,
            scratch_shapes=scratch,
        ),
        compiler_params=pltpu.CompilerParams(
            dimension_semantics=("parallel", "arbitrary"),
            vmem_limit_bytes=vmem_limit),
        cost_estimate=cost,
    )(xp, prep["w1"], prep["b1"], prep["w2"], prep["b2"])

    return out[:M, :d] if needs_pad else out


def ffn_forward(x_bsd, prep):
    """x_bsd: [batch, seq, d] -> [batch, seq, d]."""
    B, S, d = x_bsd.shape
    y2d = ffn_pallas(x_bsd.reshape(B * S, d), prep)
    return y2d.reshape(B, S, d)


def ffn_reference(x_bsd, params, compute_dtype=jnp.bfloat16):
    """Matches the kernel's precision: bf16 MXU inputs, f32 accumulation,
    f32 bias add / ReLU."""
    w1 = params["w1_t"].astype(compute_dtype)
    w2 = params["w2_t"].astype(compute_dtype)
    h = jnp.dot(x_bsd.astype(compute_dtype), w1,
                preferred_element_type=jnp.float32)
    h = jnp.maximum(h + params["b1"].astype(jnp.float32), 0.0)
    y = jnp.dot(h.astype(compute_dtype), w2,
                preferred_element_type=jnp.float32)
    y = y + params["b2"].astype(jnp.float32)
    return y.astype(x_bsd.dtype)


if __name__ == "__main__":
    batch, seq, d, d_ff = 2, 8, 32, 64
    key = jax.random.PRNGKey(0)
    kx, kp = jax.random.split(key)

    x = jax.random.normal(kx, (batch, seq, d), dtype=jnp.float32)
    params = init_ffn_params(kp, d, d_ff, dtype=jnp.float32)
    prep = prepare_ffn_params(params, compute_dtype=jnp.bfloat16)

    y = jax.block_until_ready(ffn_forward(x, prep))
    y_ref = ffn_reference(x, params)

    assert y.shape == (batch, seq, d)
    max_err = float(jnp.max(jnp.abs(y - y_ref)))
    assert jnp.allclose(y, y_ref, atol=1e-3, rtol=1e-3), (
        f"mismatch vs reference, max abs err = {max_err}")

    print("KERNEL_OK")
</pallas_src>

<mosaic_0001>
module attributes {stable_mosaic.version = 11 : i64} {
  func.func @_ffn_kernel_accout(%arg0: i32, %arg1: i32, %arg2: memref<16x128xf32, #tpu.memory_space<vmem>>, %arg3: memref<128x128xbf16, #tpu.memory_space<vmem>>, %arg4: memref<1x128xf32, #tpu.memory_space<vmem>>, %arg5: memref<128x128xbf16, #tpu.memory_space<vmem>>, %arg6: memref<1x128xf32, #tpu.memory_space<vmem>>, %arg7: memref<16x128xf32, #tpu.memory_space<vmem>>) attributes {dimension_semantics = [#tpu.dimension_semantics<parallel>, #tpu.dimension_semantics<arbitrary>], iteration_bounds = array<i64: 1, 1>, scalar_prefetch = 0 : i64, scratch_operands = 0 : i64, tpu.core_type = #tpu.core_type<tc>, window_params = [{transform_indices = @transform_0, window_bounds = array<i64: 16, 128>}, {transform_indices = @transform_1, window_bounds = array<i64: 128, 128>}, {transform_indices = @transform_2, window_bounds = array<i64: 1, 128>}, {transform_indices = @transform_3, window_bounds = array<i64: 128, 128>}, {pipeline_mode = #tpu.pipeline_mode<synchronous>, transform_indices = @transform_4, window_bounds = array<i64: 1, 128>}, {transform_indices = @transform_5, window_bounds = array<i64: 16, 128>}]} {
    %c0_i32 = arith.constant 0 : i32
    %0 = arith.cmpi eq, %arg1, %c0_i32 : i32
    %1 = arith.extui %0 : i1 to i32
    %c0_i32_0 = arith.constant 0 : i32
    %2 = arith.cmpi ne, %1, %c0_i32_0 : i32
    scf.if %2 {
      %cst_14 = arith.constant 0.000000e+00 : f32
      %18 = vector.broadcast %cst_14 : f32 to vector<16x128xf32>
      %c0_15 = arith.constant 0 : index
      %c0_16 = arith.constant 0 : index
      %19 = vector.load %arg6[%c0_15, %c0_16] : memref<1x128xf32, #tpu.memory_space<vmem>>, vector<1x128xf32>
      %20 = vector.broadcast %19 : vector<1x128xf32> to vector<16x128xf32>
      %21 = arith.addf %18, %20 : vector<16x128xf32>
      %c0_17 = arith.constant 0 : index
      %c0_18 = arith.constant 0 : index
      %22 = vector.load %arg7[%c0_17, %c0_18] : memref<16x128xf32, #tpu.memory_space<vmem>>, vector<16x128xf32>
      tpu.vector_store %arg7[%c0_17, %c0_18], %21 {strides = array<i32>} : memref<16x128xf32, #tpu.memory_space<vmem>>, vector<16x128xf32>,
    } else {
    }
    %c0 = arith.constant 0 : index
    %c0_1 = arith.constant 0 : index
    %3 = vector.load %arg2[%c0, %c0_1] : memref<16x128xf32, #tpu.memory_space<vmem>>, vector<16x128xf32>
    %4 = arith.truncf %3 : vector<16x128xf32> to vector<16x128xbf16>
    %c0_2 = arith.constant 0 : index
    %c0_3 = arith.constant 0 : index
    %5 = vector.load %arg3[%c0_2, %c0_3] : memref<128x128xbf16, #tpu.memory_space<vmem>>, vector<128x128xbf16>
    %cst = arith.constant dense<0.000000e+00> : vector<16x128xf32>
    %6 = tpu.matmul %4, %5, %cst {dimension_numbers = #tpu.dot_dimension_numbers<[1], [0], [0], [1], [0, 0, 1, 1], [], []>} : vector<16x128xbf16>, vector<128x128xbf16>, vector<16x128xf32> -> vector<16x128xf32>
    %c0_4 = arith.constant 0 : index
    %c0_5 = arith.constant 0 : index
    %7 = vector.load %arg4[%c0_4, %c0_5] : memref<1x128xf32, #tpu.memory_space<vmem>>, vector<1x128xf32>
    %8 = vector.broadcast %7 : vector<1x128xf32> to vector<16x128xf32>
    %9 = arith.addf %6, %8 : vector<16x128xf32>
    %cst_6 = arith.constant 0.000000e+00 : f32
    %10 = vector.broadcast %cst_6 : f32 to vector<16x128xf32>
    %11 = arith.maximumf %9, %10 : vector<16x128xf32>
    %c0_7 = arith.constant 0 : index
    %c0_8 = arith.constant 0 : index
    %12 = vector.load %arg7[%c0_7, %c0_8] : memref<16x128xf32, #tpu.memory_space<vmem>>, vector<16x128xf32>
    %13 = arith.truncf %11 : vector<16x128xf32> to vector<16x128xbf16>
    %c0_9 = arith.constant 0 : index
    %c0_10 = arith.constant 0 : index
    %14 = vector.load %arg5[%c0_9, %c0_10] : memref<128x128xbf16, #tpu.memory_space<vmem>>, vector<128x128xbf16>
    %cst_11 = arith.constant dense<0.000000e+00> : vector<16x128xf32>
    %15 = tpu.matmul %13, %14, %cst_11 {dimension_numbers = #tpu.dot_dimension_numbers<[1], [0], [0], [1], [0, 0, 1, 1], [], []>} : vector<16x128xbf16>, vector<128x128xbf16>, vector<16x128xf32> -> vector<16x128xf32>
    %16 = arith.addf %12, %15 : vector<16x128xf32>
    %c0_12 = arith.constant 0 : index
    %c0_13 = arith.constant 0 : index
    %17 = vector.load %arg7[%c0_12, %c0_13] : memref<16x128xf32, #tpu.memory_space<vmem>>, vector<16x128xf32>
    tpu.vector_store %arg7[%c0_12, %c0_13], %16 {strides = array<i32>} : memref<16x128xf32, #tpu.memory_space<vmem>>, vector<16x128xf32>,
    return
  }
  func.func @transform_0(%arg0: i32, %arg1: i32) -> (i32, i32) {
    %c0_i32 = arith.constant 0 : i32
    %c0_i32_0 = arith.constant 0 : i32
    return %arg0, %c0_i32 : i32, i32
  }
  func.func @transform_1(%arg0: i32, %arg1: i32) -> (i32, i32) {
    %c0_i32 = arith.constant 0 : i32
    %c0_i32_0 = arith.constant 0 : i32
    return %c0_i32, %arg1 : i32, i32
  }
  func.func @transform_2(%arg0: i32, %arg1: i32) -> (i32, i32) {
    %c0_i32 = arith.constant 0 : i32
    %c0_i32_0 = arith.constant 0 : i32
    return %c0_i32, %arg1 : i32, i32
  }
  func.func @transform_3(%arg0: i32, %arg1: i32) -> (i32, i32) {
    %c0_i32 = arith.constant 0 : i32
    %c0_i32_0 = arith.constant 0 : i32
    return %arg1, %c0_i32 : i32, i32
  }
  func.func @transform_4(%arg0: i32, %arg1: i32) -> (i32, i32) {
    %c0_i32 = arith.constant 0 : i32
    %c0_i32_0 = arith.constant 0 : i32
    %c0_i32_1 = arith.constant 0 : i32
    return %c0_i32, %c0_i32_0 : i32, i32
  }
  func.func @transform_5(%arg0: i32, %arg1: i32) -> (i32, i32) {
    %c0_i32 = arith.constant 0 : i32
    %c0_i32_0 = arith.constant 0 : i32
    return %arg0, %c0_i32 : i32, i32
  }
}

</mosaic_0001>

<llo_original>
// kernel: tpu_custom_call.1
$region0: #{tpu_custom_call.1}
  #allocation0 [shape = 'u32[]', space=smem, size = 0x4, offset = 0x4, fixed_abs, tag = 'smem constant byte address 0x4 - core index']
  #allocation1 [shape = 'u32[144,128]{1,0:T(1,128)}', space=vmem, size = 0x12000, scoped, tag = 'internal scratch']
  %s0 = inlined_call_operand.hbm [shape: f32[16,128], index: 0, kind: input, shape index: {}]
  %s1 = inlined_call_operand.hbm [shape: bf16[128,128], index: 1, kind: input, shape index: {}]
  %s2 = inlined_call_operand.vmem [shape: f32[1,128], index: 2, kind: input, shape index: {}]
  %s3 = inlined_call_operand.hbm [shape: bf16[128,128], index: 3, kind: input, shape index: {}]
  %s4 = inlined_call_operand.vmem [shape: f32[1,128], index: 4, kind: input, shape index: {}]
  %s5 = inlined_call_operand.hbm [shape: f32[16,128], index: 5, kind: output, shape index: {}]
  %s6 = sld [smem:[#allocation0]]
  $region46: #{tpu_custom_call.1} parent=0
    _
  %s8 = ssub.s32 1, %s6
  %s9 = scalar_select 0, %s8, %s6
  $region1: #{tpu_custom_call.1} parent=0
    #allocation2 [shape = 'u8[8192]{0}', space=vmem, size = 0x2000, scoped, tag = 'input window, operand 0, single buffered']
    #allocation3 [shape = 's32[1]{0}', space=sflag, size = 0x4, scoped, tag = 'scoped memory for tpu_custom_call.1']
    #allocation4 [shape = 's32[1]{0}', space=sflag, size = 0x4, scoped, tag = 'scoped memory for tpu_custom_call.1']
    #allocation5 [shape = 'u8[32768]{0}', space=vmem, size = 0x8000, scoped, tag = 'input window, operand 1, single buffered']
    #allocation6 [shape = 's32[1]{0}', space=sflag, size = 0x4, scoped, tag = 'scoped memory for tpu_custom_call.1']
    #allocation7 [shape = 'u8[32768]{0}', space=vmem, size = 0x8000, scoped, tag = 'input window, operand 3, single buffered']
    #allocation8 [shape = 'u8[8192]{0}', space=vmem, size = 0x2000, scoped, tag = 'output window, operand 0, single buffered']
    %10 = vsyncpa [#allocation3], 0
    %11 = vsyncpa [#allocation6], 0
    %12 = vsyncpa [#allocation4], 0
    // Predicated region
    $region2: #{tpu_custom_call.1} parent=1 // pred_check
      _
    $region3: #{tpu_custom_call.1} parent=1 // pred_check_branch
      %14 = sbr.rel (0) target = $region5
    $region4: #{tpu_custom_call.1} parent=1 // pred_region
      %s16 = ssub.s32 256, 256
      %17 = vsyncadd [#allocation3], %s16
      %s18 = sshll.u32 [#allocation2], 4
      %s19 = int_to_ptr.vmem [resolvable:$true] %s18
      %24 = dma.hbm_to_vmem [thread:$0]  %s0, 256, %s19, [#allocation3], 128, 128, 8
    $region5: #{tpu_custom_call.1} parent=1 // pred_fallthru
      _
    // Predicated region
    $region6: #{tpu_custom_call.1} parent=1 // pred_check
      _
    $region7: #{tpu_custom_call.1} parent=1 // pred_check_branch
      %26 = sbr.rel (0) target = $region9
    $region8: #{tpu_custom_call.1} parent=1 // pred_region
      %s28 = ssub.s32 1024, 1024
      %29 = vsyncadd [#allocation6], %s28
      %s30 = sshll.u32 [#allocation5], 4
      %s31 = int_to_ptr.vmem [resolvable:$true] %s30
      %36 = dma.hbm_to_vmem [thread:$0]  %s1, 1024, %s31, [#allocation6], 64, 64, 4
    $region9: #{tpu_custom_call.1} parent=1 // pred_fallthru
      _
    // Predicated region
    $region10: #{tpu_custom_call.1} parent=1 // pred_check
      _
    $region11: #{tpu_custom_call.1} parent=1 // pred_check_branch
      %38 = sbr.rel (0) target = $region13
    $region12: #{tpu_custom_call.1} parent=1 // pred_region
      _
    $region13: #{tpu_custom_call.1} parent=1 // pred_fallthru
      _
    // Predicated region
    $region14: #{tpu_custom_call.1} parent=1 // pred_check
      _
    $region15: #{tpu_custom_call.1} parent=1 // pred_check_branch
      %40 = sbr.rel (0) target = $region17
    $region16: #{tpu_custom_call.1} parent=1 // pred_region
      %s42 = ssub.s32 1024, 1024
      %43 = vsyncadd [#allocation6], %s42
      %s44 = sshll.u32 [#allocation7], 4
      %s45 = int_to_ptr.vmem [resolvable:$true] %s44
      %50 = dma.hbm_to_vmem [thread:$0]  %s3, 1024, %s45, [#allocation6], 64, 64, 4
    $region17: #{tpu_custom_call.1} parent=1 // pred_fallthru
      _
    // Predicated region
    $region18: #{tpu_custom_call.1} parent=1 // pred_check
      _
    $region19: #{tpu_custom_call.1} parent=1 // pred_check_branch
      %52 = sbr.rel (0) target = $region21
    $region20: #{tpu_custom_call.1} parent=1 // pred_region
      _
    $region21: #{tpu_custom_call.1} parent=1 // pred_fallthru
      _
    // Predicated region
    $region22: #{tpu_custom_call.1} parent=1 // pred_check
      _
    $region23: #{tpu_custom_call.1} parent=1 // pred_check_branch
      %54 = sbr.rel (0) target = $region25
    $region24: #{tpu_custom_call.1} parent=1 // pred_region
      %55 = dma.done [#allocation3], 256
    $region25: #{tpu_custom_call.1} parent=1 // pred_fallthru
      _
    // Predicated region
    $region26: #{tpu_custom_call.1} parent=1 // pred_check
      _
    $region27: #{tpu_custom_call.1} parent=1 // pred_check_branch
      %57 = sbr.rel (0) target = $region29
    $region28: #{tpu_custom_call.1} parent=1 // pred_region
      %58 = dma.done [#allocation6], 1024
    $region29: #{tpu_custom_call.1} parent=1 // pred_fallthru
      _
    // Predicated region
    $region30: #{tpu_custom_call.1} parent=1 // pred_check
      _
    $region31: #{tpu_custom_call.1} parent=1 // pred_check_branch
      %60 = sbr.rel (0) target = $region33
    $region32: #{tpu_custom_call.1} parent=1 // pred_region
      %61 = dma.done [#allocation6], 1024
    $region33: #{tpu_custom_call.1} parent=1 // pred_fallthru
      _
    %p63 = scmp.eq.s32.totalorder 0, 0
    // Predicated region
    $region34: #{tpu_custom_call.1} parent=1 // pred_check
      %p64 = pneg %p63
    $region35: #{tpu_custom_call.1} parent=1 // pred_check_branch
      %66 = sbr.rel (%p64) target = $region37
    $region36: #{tpu_custom_call.1} parent=1 // pred_region
      %v67 = vld [vmem:[%s4] sm:$0x1]
      %v69 = vlaneseq
      %v70 = vshrl.u32 %v69, 7
      %v71 = vsub.s32 0, %v70
      %v72 = vrot.slane %v67, %v71
      %v74 = vadd.f32 %v72, 0.0
      %75 = vst [vmem:[#allocation8] sm:$0xff] %v74
      %76 = vst [vmem:[#allocation8 + $0x8] sm:$0xff] %v74
    $region37: #{tpu_custom_call.1} parent=1 // pred_fallthru
      _
    %v77 = vld [vmem:[#allocation2] sm:$0xff]
    %v78 = vld [vmem:[#allocation2 + $0x8] sm:$0xff]
    %v79 = vpack.c.bf16 %v78, %v77
    %v80 = vld [vmem:[#allocation5] sm:$0xf]
    %v81 = vld [vmem:[#allocation5 + $0x4] sm:$0xf]
    %v82 = vld [vmem:[#allocation5 + $0x8] sm:$0xf]
    %v83 = vld [vmem:[#allocation5 + $0xc] sm:$0xf]
    %v84 = vld [vmem:[#allocation5 + $0x10] sm:$0xf]
    %v85 = vld [vmem:[#allocation5 + $0x14] sm:$0xf]
    %v86 = vld [vmem:[#allocation5 + $0x18] sm:$0xf]
    %v87 = vld [vmem:[#allocation5 + $0x1c] sm:$0xf]
    %v88 = vld [vmem:[#allocation5 + $0x20] sm:$0xf]
    %v89 = vld [vmem:[#allocation5 + $0x24] sm:$0xf]
    %v90 = vld [vmem:[#allocation5 + $0x28] sm:$0xf]
    %v91 = vld [vmem:[#allocation5 + $0x2c] sm:$0xf]
    %v92 = vld [vmem:[#allocation5 + $0x30] sm:$0xf]
    %v93 = vld [vmem:[#allocation5 + $0x34] sm:$0xf]
    %v94 = vld [vmem:[#allocation5 + $0x38] sm:$0xf]
    %v95 = vld [vmem:[#allocation5 + $0x3c] sm:$0xf]
    %v96 = vld [vmem:[%s2] sm:$0x1]
    %v98 = vlaneseq
    %v99 = vshrl.u32 %v98, 7
    %v100 = vsub.s32 0, %v99
    %v101 = vrot.slane %v96, %v100
    %v119 = vunpack.c.l.b16 %v80
    %v120 = vunpack.c.l.b16 %v81
    %v121 = vunpack.c.l.b16 %v82
    %v122 = vunpack.c.l.b16 %v83
    %v123 = vunpack.c.l.b16 %v84
    %v124 = vunpack.c.l.b16 %v85
    %v125 = vunpack.c.l.b16 %v86
    %v126 = vunpack.c.l.b16 %v87
    %v127 = vunpack.c.l.b16 %v88
    %v128 = vunpack.c.l.b16 %v89
    %v129 = vunpack.c.l.b16 %v90
    %v130 = vunpack.c.l.b16 %v91
    %v131 = vunpack.c.l.b16 %v92
    %v132 = vunpack.c.l.b16 %v93
    %v133 = vunpack.c.l.b16 %v94
    %v134 = vunpack.c.l.b16 %v95
    %v135 = vpack.c.b16 %v120, %v119
    %v136 = vpack.c.b16 %v122, %v121
    %v137 = vpack.c.b16 %v124, %v123
    %v138 = vpack.c.b16 %v126, %v125
    %v139 = vpack.c.b16 %v128, %v127
    %v140 = vpack.c.b16 %v130, %v129
    %v141 = vpack.c.b16 %v132, %v131
    %v142 = vpack.c.b16 %v134, %v133
    %151 = vmatprep.subr.bf16.mxu0 0
    %152 = vmatpush1.bf16.msra.mxu0 %v142
    %153 = vmatprep.subr.bf16.mxu0 0
    %154 = vmatpush1.bf16.msra.mxu0 %v141
    %155 = vmatprep.subr.bf16.mxu0 0
    %156 = vmatpush1.bf16.msra.mxu0 %v140
    %157 = vmatprep.subr.bf16.mxu0 0
    %158 = vmatpush1.bf16.msra.mxu0 %v139
    %159 = vmatprep.subr.bf16.mxu0 0
    %160 = vmatpush1.bf16.msra.mxu0 %v138
    %161 = vmatprep.subr.bf16.mxu0 0
    %162 = vmatpush1.bf16.msra.mxu0 %v137
    %163 = vmatprep.subr.bf16.mxu0 0
    %164 = vmatpush1.bf16.msra.mxu0 %v136
    %165 = vmatprep.subr.bf16.mxu0 0
    %166 = vmatpush1.bf16.msra.mxu0 %v135
    %167 = vmatprep.subr.bf16.mxu0 0
    %168 = vmatpush2.bf16.msra.mxu0 0
    %169 = vmatprep.subr.bf16.mxu0 0
    %170 = vmatpush2.bf16.msra.mxu0 0
    %171 = vmatprep.subr.bf16.mxu0 0
    %172 = vmatpush2.bf16.msra.mxu0 0
    %173 = vmatprep.subr.bf16.mxu0 0
    %174 = vmatpush2.bf16.msra.mxu0 0
    %175 = vmatprep.subr.bf16.mxu0 0
    %176 = vmatpush2.bf16.msra.mxu0 0
    %177 = vmatprep.subr.bf16.mxu0 0
    %178 = vmatpush2.bf16.msra.mxu0 0
    %179 = vmatprep.subr.bf16.mxu0 0
    %180 = vmatpush2.bf16.msra.mxu0 0
    %181 = vmatprep.subr.bf16.mxu0 0
    %182 = vmatpush2.bf16.msra.mxu0 0
    %183 = vmatprep.mubr.bf16.mxu0 0
    %184 = vmatmul.mubr.bf16.gmra.mxu0 %v79
    %v185 = vpop.f32.mrf.mxu0
    %v186 = vadd.f32 %v101, %v185
    %v187 = vpop.f32.mrf.mxu0
    %v188 = vpop.f32.mrf.mxu0
    %v189 = vadd.f32 %v101, %v188
    %v190 = vpop.f32.mrf.mxu0
    %191 = vdwg.mxu0
    %v192 = vmax.f32 %v186, 0.0
    %v193 = vmax.f32 %v189, 0.0
    %v194 = vld [vmem:[#allocation8] sm:$0xff]
    %v195 = vld [vmem:[#allocation8 + $0x8] sm:$0xff]
    %v196 = vpack.c.bf16 %v193, %v192
    %v197 = vld [vmem:[#allocation7] sm:$0xf]
    %v198 = vld [vmem:[#allocation7 + $0x4] sm:$0xf]
    %v199 = vld [vmem:[#allocation7 + $0x8] sm:$0xf]
    %v200 = vld [vmem:[#allocation7 + $0xc] sm:$0xf]
    %v201 = vld [vmem:[#allocation7 + $0x10] sm:$0xf]
    %v202 = vld [vmem:[#allocation7 + $0x14] sm:$0xf]
    %v203 = vld [vmem:[#allocation7 + $0x18] sm:$0xf]
    %v204 = vld [vmem:[#allocation7 + $0x1c] sm:$0xf]
    %v205 = vld [vmem:[#allocation7 + $0x20] sm:$0xf]
    %v206 = vld [vmem:[#allocation7 + $0x24] sm:$0xf]
    %v207 = vld [vmem:[#allocation7 + $0x28] sm:$0xf]
    %v208 = vld [vmem:[#allocation7 + $0x2c] sm:$0xf]
    %v209 = vld [vmem:[#allocation7 + $0x30] sm:$0xf]
    %v210 = vld [vmem:[#allocation7 + $0x34] sm:$0xf]
    %v211 = vld [vmem:[#allocation7 + $0x38] sm:$0xf]
    %v212 = vld [vmem:[#allocation7 + $0x3c] sm:$0xf]
    %v229 = vunpack.c.l.b16 %v197
    %v230 = vunpack.c.l.b16 %v198
    %v231 = vunpack.c.l.b16 %v199
    %v232 = vunpack.c.l.b16 %v200
    %v233 = vunpack.c.l.b16 %v201
    %v234 = vunpack.c.l.b16 %v202
    %v235 = vunpack.c.l.b16 %v203
    %v236 = vunpack.c.l.b16 %v204
    %v237 = vunpack.c.l.b16 %v205
    %v238 = vunpack.c.l.b16 %v206
    %v239 = vunpack.c.l.b16 %v207
    %v240 = vunpack.c.l.b16 %v208
    %v241 = vunpack.c.l.b16 %v209
    %v242 = vunpack.c.l.b16 %v210
    %v243 = vunpack.c.l.b16 %v211
    %v244 = vunpack.c.l.b16 %v212
    %v245 = vpack.c.b16 %v230, %v229
    %v246 = vpack.c.b16 %v232, %v231
    %v247 = vpack.c.b16 %v234, %v233
    %v248 = vpack.c.b16 %v236, %v235
    %v249 = vpack.c.b16 %v238, %v237
    %v250 = vpack.c.b16 %v240, %v239
    %v251 = vpack.c.b16 %v242, %v241
    %v252 = vpack.c.b16 %v244, %v243
    %261 = vmatprep.subr.bf16.mxu0 0
    %262 = vmatpush1.bf16.msra.mxu0 %v252
    %263 = vmatprep.subr.bf16.mxu0 0
    %264 = vmatpush1.bf16.msra.mxu0 %v251
    %265 = vmatprep.subr.bf16.mxu0 0
    %266 = vmatpush1.bf16.msra.mxu0 %v250
    %267 = vmatprep.subr.bf16.mxu0 0
    %268 = vmatpush1.bf16.msra.mxu0 %v249
    %269 = vmatprep.subr.bf16.mxu0 0
    %270 = vmatpush1.bf16.msra.mxu0 %v248
    %271 = vmatprep.subr.bf16.mxu0 0
    %272 = vmatpush1.bf16.msra.mxu0 %v247
    %273 = vmatprep.subr.bf16.mxu0 0
    %274 = vmatpush1.bf16.msra.mxu0 %v246
    %275 = vmatprep.subr.bf16.mxu0 0
    %276 = vmatpush1.bf16.msra.mxu0 %v245
    %277 = vmatprep.subr.bf16.mxu0 0
    %278 = vmatpush2.bf16.msra.mxu0 0
    %279 = vmatprep.subr.bf16.mxu0 0
    %280 = vmatpush2.bf16.msra.mxu0 0
    %281 = vmatprep.subr.bf16.mxu0 0
    %282 = vmatpush2.bf16.msra.mxu0 0
    %283 = vmatprep.subr.bf16.mxu0 0
    %284 = vmatpush2.bf16.msra.mxu0 0
    %285 = vmatprep.subr.bf16.mxu0 0
    %286 = vmatpush2.bf16.msra.mxu0 0
    %287 = vmatprep.subr.bf16.mxu0 0
    %288 = vmatpush2.bf16.msra.mxu0 0
    %289 = vmatprep.subr.bf16.mxu0 0
    %290 = vmatpush2.bf16.msra.mxu0 0
    %291 = vmatprep.subr.bf16.mxu0 0
    %292 = vmatpush2.bf16.msra.mxu0 0
    %293 = vmatprep.mubr.bf16.mxu0 0
    %294 = vmatmul.mubr.bf16.gmra.mxu0 %v196
    %v295 = vpop.f32.mrf.mxu0
    %v296 = vadd.f32 0.0, %v295
    %v297 = vpop.f32.mrf.mxu0
    %v298 = vpop.f32.mrf.mxu0
    %v299 = vadd.f32 0.0, %v298
    %v300 = vpop.f32.mrf.mxu0
    %301 = vdwg.mxu0
    %v302 = vadd.f32 %v194, %v296
    %v303 = vadd.f32 %v195, %v299
    %304 = vst [vmem:[#allocation8] sm:$0xff] %v302
    %305 = vst [vmem:[#allocation8 + $0x8] sm:$0xff] %v303
    // Predicated region
    $region38: #{tpu_custom_call.1} parent=1 // pred_check
      _
    $region39: #{tpu_custom_call.1} parent=1 // pred_check_branch
      %307 = sbr.rel (0) target = $region41
    $region40: #{tpu_custom_call.1} parent=1 // pred_region
      %s309 = ssub.s32 256, 256
      %310 = vsyncadd [#allocation4], %s309
      %s311 = sshll.u32 [#allocation8], 4
      %s312 = int_to_ptr.vmem [resolvable:$true] %s311
      %317 = dma.vmem_to_hbm [thread:$0]  %s312, 256, %s5, [#allocation4], 128, 128, 8
    $region41: #{tpu_custom_call.1} parent=1 // pred_fallthru
      _
    // Predicated region
    $region42: #{tpu_custom_call.1} parent=1 // pred_check
      _
    $region43: #{tpu_custom_call.1} parent=1 // pred_check_branch
      %319 = sbr.rel (0) target = $region45
    $region44: #{tpu_custom_call.1} parent=1 // pred_region
      %320 = dma.done [#allocation4], 256
    $region45: #{tpu_custom_call.1} parent=1 // pred_fallthru
      _
    %321 = vsyncpa [#allocation3], 1
    %322 = vsyncpa [#allocation6], 1
    %323 = vsyncpa [#allocation4], 1

</llo_original>
